<compile_context>
chip_gen: v6e
topology: v6e:2x2x1
jax: 0.10.0
libtpu: 0.0.40
codegen_flags: <defaults>
</compile_context>

<pallas_src>
import functools

import jax
import jax.numpy as jnp
from jax.experimental import pallas as pl
from jax.experimental.pallas import tpu as pltpu

_LANE = 128
_SUBLANE = 8


def _round_up(v, m):
    return (v + m - 1) // m * m


def _cdiv(a, b):
    return (a + b - 1) // b


# ----------------------------- shared gate + LN math --------------------------

def _gru_ln_math(x_bf16, h_f32, wih, whh, b_rz, b_in, b_hn, gamma, beta,
                 *, n_hidden, hp, eps):
    """GRUCell + LayerNorm for one (TB, ...) tile.  Returns f32 (TB, Hp).

    Padded (>= n_hidden) columns of the result are exactly zero, because the
    padded weight columns / biases / gamma / beta are zero and the incoming
    padded h columns are zero.
    """
    Hp = hp
    # MXU matmuls: bf16 operands, f32 accumulation.
    gi = jnp.dot(x_bf16, wih, preferred_element_type=jnp.float32)           # (TB, 3Hp)
    gh = jnp.dot(h_f32.astype(jnp.bfloat16), whh,
                 preferred_element_type=jnp.float32)                        # (TB, 3Hp)

    # Fused r/z gates; biases pre-combined (b_rz = b_ir+b_hr | b_iz+b_hz).
    rz = jax.nn.sigmoid(gi[:, :2 * Hp] + gh[:, :2 * Hp] + b_rz)
    r = rz[:, :Hp]
    z = rz[:, Hp:]
    # n gate: b_hn must sit inside the r*(...) term (torch.nn.GRUCell).
    n = jnp.tanh(gi[:, 2 * Hp:] + b_in + r * (gh[:, 2 * Hp:] + b_hn))
    h_new = (1.0 - z) * n + z * h_f32          # padded columns exactly 0

    # LayerNorm over the real H columns.  Padded columns contribute 0 to both
    # sums, so E[x] and E[x^2] over Hp lanes divided by H are exact.
    inv_h = 1.0 / float(n_hidden)
    mean = jnp.sum(h_new, axis=-1, keepdims=True) * inv_h
    ex2 = jnp.sum(h_new * h_new, axis=-1, keepdims=True) * inv_h
    var = ex2 - mean * mean
    normed = (h_new - mean) * jax.lax.rsqrt(var + eps)
    # gamma/beta are zero in padded columns -> padded output columns are 0.
    return normed * gamma + beta


# ----------------------------- kernels ----------------------------------------

def _gru_layernorm_step_kernel(x_ref, h_ref, wih_ref, whh_ref, brz_ref,
                               bin_ref, bhn_ref, gamma_ref, beta_ref,
                               out_ref, *, n_hidden, hp, eps):
    """Single-step GRU+LN for one batch tile."""
    y = _gru_ln_math(x_ref[...], h_ref[...], wih_ref[...], whh_ref[...],
                     brz_ref[...], bin_ref[...], bhn_ref[...],
                     gamma_ref[...], beta_ref[...],
                     n_hidden=n_hidden, hp=hp, eps=eps)
    out_ref[...] = y.astype(out_ref.dtype)


def _gru_layernorm_seq_kernel(h0_ref, x_ref, wih_ref, whh_ref, brz_ref,
                              bin_ref, bhn_ref, gamma_ref, beta_ref,
                              out_ref, h_scr, *, n_hidden, hp, eps):
    """Fused time recurrence: grid axis 1 is the timestep ("arbitrary").

    Weights stay VMEM-resident across all timesteps; the hidden state lives in
    the f32 VMEM scratch `h_scr` (no HBM round trip between steps); only x_t
    tiles stream in and normalized h_t tiles stream out.
    """
    @pl.when(pl.program_id(1) == 0)
    def _():
        h_scr[...] = h0_ref[...]

    y = _gru_ln_math(x_ref[...], h_scr[...], wih_ref[...], whh_ref[...],
                     brz_ref[...], bin_ref[...], bhn_ref[...],
                     gamma_ref[...], beta_ref[...],
                     n_hidden=n_hidden, hp=hp, eps=eps)
    h_scr[...] = y
    out_ref[...] = y.astype(out_ref.dtype)


# ----------------------------- parameter prep ---------------------------------

def prepare_params(w_ih, w_hh, b_ih, b_hh, gamma, beta, *, lane_multiple=_LANE):
    """One-time prep: transpose, per-gate lane pad, bf16 cast, bias combine.

    w_ih: (3H, I), w_hh: (3H, H) in torch layout (gate order r, z, n).
    b_ih, b_hh: (3H,).  gamma, beta: (H,).
    lane_multiple: 128 default; 256 can help small H on v6e's 2x256 MXU.
    """
    three_h, n_inputs = w_ih.shape
    n_hidden = three_h // 3
    hp = _round_up(n_hidden, lane_multiple)
    pad_h = hp - n_hidden

    def pad_gate_cols(w_t):                       # (K, 3H) -> (K, 3*Hp)
        k = w_t.shape[0]
        w3 = w_t.reshape(k, 3, n_hidden)
        w3 = jnp.pad(w3, ((0, 0), (0, 0), (0, pad_h)))
        return w3.reshape(k, 3 * hp)

    wih_t = jnp.asarray(w_ih, jnp.float32).T                                # (I, 3H)
    whh_t = jnp.asarray(w_hh, jnp.float32).T                                # (H, 3H)
    wih_p = pad_gate_cols(wih_t).astype(jnp.bfloat16)                       # (I, 3Hp)
    whh_p = jnp.pad(pad_gate_cols(whh_t),
                    ((0, pad_h), (0, 0))).astype(jnp.bfloat16)              # (Hp, 3Hp)

    b_ih3 = jnp.asarray(b_ih, jnp.float32).reshape(3, n_hidden)
    b_hh3 = jnp.asarray(b_hh, jnp.float32).reshape(3, n_hidden)
    # r/z biases can be pre-summed; n-gate biases must stay separate.
    b_rz = jnp.pad(b_ih3[:2] + b_hh3[:2], ((0, 0), (0, pad_h))).reshape(1, 2 * hp)
    b_in = jnp.pad(b_ih3[2:3], ((0, 0), (0, pad_h)))                        # (1, Hp)
    b_hn = jnp.pad(b_hh3[2:3], ((0, 0), (0, pad_h)))                        # (1, Hp)

    gamma_p = jnp.pad(jnp.asarray(gamma, jnp.float32).reshape(1, n_hidden),
                      ((0, 0), (0, pad_h)))
    beta_p = jnp.pad(jnp.asarray(beta, jnp.float32).reshape(1, n_hidden),
                     ((0, 0), (0, pad_h)))

    return {
        "n_hidden": n_hidden, "n_inputs": n_inputs, "hp": hp,
        "wih": wih_p, "whh": whh_p,
        "brz": b_rz, "bin": b_in, "bhn": b_hn,
        "gamma": gamma_p, "beta": beta_p,
    }


# ----------------------------- tiling / VMEM helpers ---------------------------

def _choose_batch_tile(B, max_batch_tile, min_batch_tiles):
    """Balanced batch tiles: multiple of 8 sublanes, minimal padding."""
    n_tiles = max(_cdiv(B, max_batch_tile), min_batch_tiles, 1)
    tb = _round_up(_cdiv(B, n_tiles), _SUBLANE)
    return tb, n_tiles


def _vmem_limit_bytes(*, n_inputs, hp, tb, out_itemsize, seq):
    weights = (n_inputs + hp) * 3 * hp * 2          # bf16, Buffered(1)
    small = (2 * hp + 4 * hp) * 4                   # b_rz, b_in, b_hn, gamma, beta
    x_tiles = 2 * tb * n_inputs * 2                 # bf16, double-buffered
    h_tiles = 2 * tb * hp * 4                       # f32 h / h0
    out_tiles = 2 * tb * hp * out_itemsize
    scratch = tb * hp * 4 if seq else 0
    need = weights + small + x_tiles + h_tiles + out_tiles + scratch
    # Headroom for compiler-internal scratch; never below the 32 MiB default.
    return int(min(max(need + (4 << 20), 32 << 20), 128 << 20))


# ----------------------------- wrappers ----------------------------------------

def gru_layernorm(x, h, params, *, eps=1e-5, max_batch_tile=256,
                  min_batch_tiles=1, out_dtype=None):
    """Single-step forward.  x: (B, I), h: (B, H) -> (B, H).

    On v7x pass min_batch_tiles=2 so both TensorCores get a parallel grid step.
    """
    B, I = x.shape
    H = params["n_hidden"]
    Hp = params["hp"]
    assert h.shape == (B, H)
    assert I == params["n_inputs"]
    out_dtype = x.dtype if out_dtype is None else out_dtype
    out_bytes = jnp.dtype(out_dtype).itemsize

    TB, n_tiles = _choose_batch_tile(B, max_batch_tile, min_batch_tiles)
    Bp = TB * n_tiles

    # x is fed to the kernel in bf16 (half the activation DMA); h stays f32.
    x_p = jnp.pad(x, ((0, Bp - B), (0, 0))).astype(jnp.bfloat16)
    h_p = jnp.pad(h.astype(jnp.float32), ((0, Bp - B), (0, Hp - H)))

    kernel = functools.partial(_gru_layernorm_step_kernel,
                               n_hidden=H, hp=Hp, eps=eps)

    tiled = lambda shape: pl.BlockSpec(shape, lambda i: (i, 0))
    resident = lambda shape: pl.BlockSpec(shape, lambda i: (0, 0),
                                          pipeline_mode=pl.Buffered(1))

    cost = pl.CostEstimate(
        flops=int(2 * Bp * (I + Hp) * 3 * Hp),
        transcendentals=int(3 * Bp * Hp),
        bytes_accessed=int((I + Hp) * 3 * Hp * 2 + 6 * Hp * 4
                           + Bp * I * 2 + Bp * Hp * 4 + Bp * Hp * out_bytes))

    out = pl.pallas_call(
        kernel,
        out_shape=jax.ShapeDtypeStruct((Bp, Hp), out_dtype),
        grid=(n_tiles,),
        in_specs=[
            tiled((TB, I)),            # x tile (bf16)
            tiled((TB, Hp)),           # h tile (f32)
            resident((I, 3 * Hp)),     # W_ih^T (bf16)
            resident((Hp, 3 * Hp)),    # W_hh^T (bf16)
            resident((1, 2 * Hp)),     # b_ir+b_hr | b_iz+b_hz
            resident((1, Hp)),         # b_in
            resident((1, Hp)),         # b_hn
            resident((1, Hp)),         # gamma
            resident((1, Hp)),         # beta
        ],
        out_specs=tiled((TB, Hp)),
        compiler_params=pltpu.CompilerParams(
            dimension_semantics=("parallel",),
            vmem_limit_bytes=_vmem_limit_bytes(n_inputs=I, hp=Hp, tb=TB,
                                               out_itemsize=out_bytes,
                                               seq=False)),
        cost_estimate=cost,
    )(x_p, h_p, params["wih"], params["whh"], params["brz"], params["bin"],
      params["bhn"], params["gamma"], params["beta"])

    return out[:B, :H]


def gru_layernorm_sequence(xs, h0, params, *, eps=1e-5, max_batch_tile=256,
                           min_batch_tiles=1, out_dtype=None):
    """Fused recurrence.  xs: (T, B, I), h0: (B, H) -> (T, B, H).

    One pallas_call for the whole sequence: weights are DMA'd to VMEM once,
    the hidden state is carried in a VMEM scratch, and only x_t / h_t tiles
    stream through the pipeline.
    """
    T, B, I = xs.shape
    H = params["n_hidden"]
    Hp = params["hp"]
    assert h0.shape == (B, H)
    assert I == params["n_inputs"]
    out_dtype = xs.dtype if out_dtype is None else out_dtype
    out_bytes = jnp.dtype(out_dtype).itemsize

    TB, n_tiles = _choose_batch_tile(B, max_batch_tile, min_batch_tiles)
    Bp = TB * n_tiles

    xs_p = jnp.pad(xs, ((0, 0), (0, Bp - B), (0, 0))).astype(jnp.bfloat16)
    h0_p = jnp.pad(h0.astype(jnp.float32), ((0, Bp - B), (0, Hp - H)))

    kernel = functools.partial(_gru_layernorm_seq_kernel,
                               n_hidden=H, hp=Hp, eps=eps)

    resident = lambda shape: pl.BlockSpec(shape, lambda i, t: (0, 0),
                                          pipeline_mode=pl.Buffered(1))

    cost = pl.CostEstimate(
        flops=int(2 * T * Bp * (I + Hp) * 3 * Hp),
        transcendentals=int(3 * T * Bp * Hp),
        bytes_accessed=int((I + Hp) * 3 * Hp * 2 + 6 * Hp * 4
                           + T * Bp * I * 2 + Bp * Hp * 4
                           + T * Bp * Hp * out_bytes))

    out = pl.pallas_call(
        kernel,
        out_shape=jax.ShapeDtypeStruct((T, Bp, Hp), out_dtype),
        grid=(n_tiles, T),
        in_specs=[
            pl.BlockSpec((TB, Hp), lambda i, t: (i, 0)),        # h0 tile (f32)
            pl.BlockSpec((None, TB, I), lambda i, t: (t, i, 0)),  # x_t tile (bf16)
            resident((I, 3 * Hp)),
            resident((Hp, 3 * Hp)),
            resident((1, 2 * Hp)),
            resident((1, Hp)),
            resident((1, Hp)),
            resident((1, Hp)),
            resident((1, Hp)),
        ],
        out_specs=pl.BlockSpec((None, TB, Hp), lambda i, t: (t, i, 0)),
        scratch_shapes=[pltpu.VMEM((TB, Hp), jnp.float32)],     # carried h
        compiler_params=pltpu.CompilerParams(
            dimension_semantics=("parallel", "arbitrary"),
            vmem_limit_bytes=_vmem_limit_bytes(n_inputs=I, hp=Hp, tb=TB,
                                               out_itemsize=out_bytes,
                                               seq=True)),
        cost_estimate=cost,
    )(h0_p, xs_p, params["wih"], params["whh"], params["brz"], params["bin"],
      params["bhn"], params["gamma"], params["beta"])

    return out[:, :B, :H]


# ---------------- deterministic parameter init (mirrors the module) -----------

def orthogonal_init(key, rows, cols, gain):
    """torch.nn.init.orthogonal_ equivalent (gain * Q from QR of a normal mat)."""
    a = jax.random.normal(key, (rows, cols), dtype=jnp.float32)
    transposed = rows < cols
    if transposed:
        a = a.T
    q, r = jnp.linalg.qr(a)
    q = q * jnp.sign(jnp.diag(r))[None, :]
    if transposed:
        q = q.T
    return gain * q


def init_params(key, n_inputs, n_hidden):
    k1, k2, k3, k4 = jax.random.split(key, 4)
    w_ih = orthogonal_init(k1, 3 * n_hidden, n_inputs, 0.5)   # (3H, I)
    w_hh = orthogonal_init(k2, 3 * n_hidden, n_hidden, 0.5)   # (3H, H)
    bound = 1.0 / jnp.sqrt(jnp.float32(n_hidden))
    b_ih = jax.random.uniform(k3, (3 * n_hidden,), jnp.float32, -bound, bound)
    b_hh = jax.random.uniform(k4, (3 * n_hidden,), jnp.float32, -bound, bound)
    gamma = jnp.ones((n_hidden,), jnp.float32)                # LayerNorm default
    beta = jnp.zeros((n_hidden,), jnp.float32)
    return w_ih, w_hh, b_ih, b_hh, gamma, beta


def reference_forward(x, h, w_ih, w_hh, b_ih, b_hh, gamma, beta, eps=1e-5):
    """Pure-JAX f32 reference matching torch.nn.GRUCell + LayerNorm."""
    gi = x @ w_ih.T + b_ih
    gh = h @ w_hh.T + b_hh
    H = h.shape[-1]
    r = jax.nn.sigmoid(gi[:, :H] + gh[:, :H])
    z = jax.nn.sigmoid(gi[:, H:2 * H] + gh[:, H:2 * H])
    n = jnp.tanh(gi[:, 2 * H:] + r * gh[:, 2 * H:])
    h_new = (1.0 - z) * n + z * h
    mean = jnp.mean(h_new, axis=-1, keepdims=True)
    var = jnp.mean((h_new - mean) ** 2, axis=-1, keepdims=True)
    return (h_new - mean) / jnp.sqrt(var + eps) * gamma + beta


if __name__ == "__main__":
    B, n_inputs, n_hidden, T = 8, 16, 32, 6

    key = jax.random.PRNGKey(0)
    kx, kh, kp, ks = jax.random.split(key, 4)
    x = jax.random.normal(kx, (B, n_inputs), dtype=jnp.float32)
    h = jax.random.normal(kh, (B, n_hidden), dtype=jnp.float32)
    xs = jax.random.normal(ks, (T, B, n_inputs), dtype=jnp.float32)

    w_ih, w_hh, b_ih, b_hh, gamma, beta = init_params(kp, n_inputs, n_hidden)
    params = prepare_params(w_ih, w_hh, b_ih, b_hh, gamma, beta)  # one-time prep

    # ---- single-step kernel vs f32 reference ----
    out = jax.block_until_ready(gru_layernorm(x, h, params))
    ref = reference_forward(x, h, w_ih, w_hh, b_ih, b_hh, gamma, beta)
    assert out.shape == (B, n_hidden)
    max_err = float(jnp.max(jnp.abs(out - ref)))
    # bf16 MXU operands (f32 accumulation) => loosened tolerance vs f32 ref.
    assert max_err < 5e-2, f"step mismatch vs reference: max abs err {max_err}"

    # ---- fused-sequence kernel vs iterated step kernel (same bf16 math) ----
    hs_seq = jax.block_until_ready(gru_layernorm_sequence(xs, h, params))
    assert hs_seq.shape == (T, B, n_hidden)
    h_it = h
    step_outs = []
    for t in range(T):
        h_it = gru_layernorm(xs[t], h_it, params)
        step_outs.append(h_it)
    hs_step = jnp.stack(step_outs, axis=0)
    seq_err = float(jnp.max(jnp.abs(hs_seq - hs_step)))
    assert seq_err < 1e-4, f"sequence/step mismatch: max abs err {seq_err}"

    print("KERNEL_OK")
</pallas_src>

<mosaic_0001>
module attributes {stable_mosaic.version = 11 : i64} {
  func.func @_gru_layernorm_step_kernel(%arg0: i32, %arg1: memref<8x16xbf16, #tpu.memory_space<vmem>>, %arg2: memref<8x128xf32, #tpu.memory_space<vmem>>, %arg3: memref<16x384xbf16, #tpu.memory_space<vmem>>, %arg4: memref<128x384xbf16, #tpu.memory_space<vmem>>, %arg5: memref<1x256xf32, #tpu.memory_space<vmem>>, %arg6: memref<1x128xf32, #tpu.memory_space<vmem>>, %arg7: memref<1x128xf32, #tpu.memory_space<vmem>>, %arg8: memref<1x128xf32, #tpu.memory_space<vmem>>, %arg9: memref<1x128xf32, #tpu.memory_space<vmem>>, %arg10: memref<8x128xf32, #tpu.memory_space<vmem>>) attributes {dimension_semantics = [#tpu.dimension_semantics<parallel>], iteration_bounds = array<i64: 1>, scalar_prefetch = 0 : i64, scratch_operands = 0 : i64, tpu.core_type = #tpu.core_type<tc>, window_params = [{transform_indices = @transform_0, window_bounds = array<i64: 8, 16>}, {transform_indices = @transform_1, window_bounds = array<i64: 8, 128>}, {pipeline_mode = #tpu.pipeline_mode<synchronous>, transform_indices = @transform_2, window_bounds = array<i64: 16, 384>}, {pipeline_mode = #tpu.pipeline_mode<synchronous>, transform_indices = @transform_3, window_bounds = array<i64: 128, 384>}, {pipeline_mode = #tpu.pipeline_mode<synchronous>, transform_indices = @transform_4, window_bounds = array<i64: 1, 256>}, {pipeline_mode = #tpu.pipeline_mode<synchronous>, transform_indices = @transform_5, window_bounds = array<i64: 1, 128>}, {pipeline_mode = #tpu.pipeline_mode<synchronous>, transform_indices = @transform_6, window_bounds = array<i64: 1, 128>}, {pipeline_mode = #tpu.pipeline_mode<synchronous>, transform_indices = @transform_7, window_bounds = array<i64: 1, 128>}, {pipeline_mode = #tpu.pipeline_mode<synchronous>, transform_indices = @transform_8, window_bounds = array<i64: 1, 128>}, {transform_indices = @transform_9, window_bounds = array<i64: 8, 128>}]} {
    %c0 = arith.constant 0 : index
    %c0_0 = arith.constant 0 : index
    %0 = vector.load %arg1[%c0, %c0_0] : memref<8x16xbf16, #tpu.memory_space<vmem>>, vector<8x16xbf16>
    %c0_1 = arith.constant 0 : index
    %c0_2 = arith.constant 0 : index
    %1 = vector.load %arg2[%c0_1, %c0_2] : memref<8x128xf32, #tpu.memory_space<vmem>>, vector<8x128xf32>
    %c0_3 = arith.constant 0 : index
    %c0_4 = arith.constant 0 : index
    %2 = vector.load %arg3[%c0_3, %c0_4] : memref<16x384xbf16, #tpu.memory_space<vmem>>, vector<16x384xbf16>
    %c0_5 = arith.constant 0 : index
    %c0_6 = arith.constant 0 : index
    %3 = vector.load %arg4[%c0_5, %c0_6] : memref<128x384xbf16, #tpu.memory_space<vmem>>, vector<128x384xbf16>
    %c0_7 = arith.constant 0 : index
    %c0_8 = arith.constant 0 : index
    %4 = vector.load %arg5[%c0_7, %c0_8] : memref<1x256xf32, #tpu.memory_space<vmem>>, vector<1x256xf32>
    %c0_9 = arith.constant 0 : index
    %c0_10 = arith.constant 0 : index
    %5 = vector.load %arg6[%c0_9, %c0_10] : memref<1x128xf32, #tpu.memory_space<vmem>>, vector<1x128xf32>
    %c0_11 = arith.constant 0 : index
    %c0_12 = arith.constant 0 : index
    %6 = vector.load %arg7[%c0_11, %c0_12] : memref<1x128xf32, #tpu.memory_space<vmem>>, vector<1x128xf32>
    %c0_13 = arith.constant 0 : index
    %c0_14 = arith.constant 0 : index
    %7 = vector.load %arg8[%c0_13, %c0_14] : memref<1x128xf32, #tpu.memory_space<vmem>>, vector<1x128xf32>
    %c0_15 = arith.constant 0 : index
    %c0_16 = arith.constant 0 : index
    %8 = vector.load %arg9[%c0_15, %c0_16] : memref<1x128xf32, #tpu.memory_space<vmem>>, vector<1x128xf32>
    %cst = arith.constant dense<0.000000e+00> : vector<8x384xf32>
    %9 = tpu.matmul %0, %2, %cst {dimension_numbers = #tpu.dot_dimension_numbers<[1], [0], [0], [1], [0, 0, 1, 1], [], []>} : vector<8x16xbf16>, vector<16x384xbf16>, vector<8x384xf32> -> vector<8x384xf32>
    %10 = arith.truncf %1 : vector<8x128xf32> to vector<8x128xbf16>
    %cst_17 = arith.constant dense<0.000000e+00> : vector<8x384xf32>
    %11 = tpu.matmul %10, %3, %cst_17 {dimension_numbers = #tpu.dot_dimension_numbers<[1], [0], [0], [1], [0, 0, 1, 1], [], []>} : vector<8x128xbf16>, vector<128x384xbf16>, vector<8x384xf32> -> vector<8x384xf32>
    %12 = vector.extract_strided_slice %9 {offsets = [0, 0], sizes = [8, 256], strides = [1, 1]} : vector<8x384xf32> to vector<8x256xf32>
    %13 = vector.extract_strided_slice %11 {offsets = [0, 0], sizes = [8, 256], strides = [1, 1]} : vector<8x384xf32> to vector<8x256xf32>
    %14 = arith.addf %12, %13 : vector<8x256xf32>
    %15 = vector.broadcast %4 : vector<1x256xf32> to vector<8x256xf32>
    %16 = arith.addf %14, %15 : vector<8x256xf32>
    %17 = arith.negf %16 : vector<8x256xf32>
    %18 = math.exp %17 : vector<8x256xf32>
    %cst_18 = arith.constant 1.000000e+00 : f32
    %19 = vector.broadcast %cst_18 : f32 to vector<8x256xf32>
    %20 = arith.addf %19, %18 : vector<8x256xf32>
    %21 = arith.divf %19, %20 : vector<8x256xf32>
    %22 = vector.extract_strided_slice %21 {offsets = [0, 0], sizes = [8, 128], strides = [1, 1]} : vector<8x256xf32> to vector<8x128xf32>
    %23 = vector.extract_strided_slice %21 {offsets = [0, 128], sizes = [8, 128], strides = [1, 1]} : vector<8x256xf32> to vector<8x128xf32>
    %24 = vector.extract_strided_slice %9 {offsets = [0, 256], sizes = [8, 128], strides = [1, 1]} : vector<8x384xf32> to vector<8x128xf32>
    %25 = vector.broadcast %5 : vector<1x128xf32> to vector<8x128xf32>
    %26 = arith.addf %24, %25 : vector<8x128xf32>
    %27 = vector.extract_strided_slice %11 {offsets = [0, 256], sizes = [8, 128], strides = [1, 1]} : vector<8x384xf32> to vector<8x128xf32>
    %28 = vector.broadcast %6 : vector<1x128xf32> to vector<8x128xf32>
    %29 = arith.addf %27, %28 : vector<8x128xf32>
    %30 = arith.mulf %22, %29 : vector<8x128xf32>
    %31 = arith.addf %26, %30 : vector<8x128xf32>
    %32 = math.tanh %31 : vector<8x128xf32>
    %cst_19 = arith.constant 1.000000e+00 : f32
    %33 = vector.broadcast %cst_19 : f32 to vector<8x128xf32>
    %34 = arith.subf %33, %23 : vector<8x128xf32>
    %35 = arith.mulf %34, %32 : vector<8x128xf32>
    %36 = arith.mulf %23, %1 : vector<8x128xf32>
    %37 = arith.addf %35, %36 : vector<8x128xf32>
    %cst_20 = arith.constant dense<0.000000e+00> : vector<8xf32>
    %38 = vector.multi_reduction <add>, %37, %cst_20 [1] : vector<8x128xf32> to vector<8xf32>
    %39 = vector.shape_cast %38 : vector<8xf32> to vector<8x1xf32>
    %cst_21 = arith.constant 3.125000e-02 : f32
    %40 = vector.broadcast %cst_21 : f32 to vector<8x1xf32>
    %41 = arith.mulf %39, %40 : vector<8x1xf32>
    %42 = arith.mulf %37, %37 : vector<8x128xf32>
    %cst_22 = arith.constant dense<0.000000e+00> : vector<8xf32>
    %43 = vector.multi_reduction <add>, %42, %cst_22 [1] : vector<8x128xf32> to vector<8xf32>
    %44 = vector.shape_cast %43 : vector<8xf32> to vector<8x1xf32>
    %cst_23 = arith.constant 3.125000e-02 : f32
    %45 = vector.broadcast %cst_23 : f32 to vector<8x1xf32>
    %46 = arith.mulf %44, %45 : vector<8x1xf32>
    %47 = arith.mulf %41, %41 : vector<8x1xf32>
    %48 = arith.subf %46, %47 : vector<8x1xf32>
    %49 = vector.broadcast %41 : vector<8x1xf32> to vector<8x128xf32>
    %50 = arith.subf %37, %49 : vector<8x128xf32>
    %cst_24 = arith.constant 9.99999974E-6 : f32
    %51 = vector.broadcast %cst_24 : f32 to vector<8x1xf32>
    %52 = arith.addf %48, %51 : vector<8x1xf32>
    %53 = math.rsqrt %52 : vector<8x1xf32>
    %54 = vector.broadcast %53 : vector<8x1xf32> to vector<8x128xf32>
    %55 = arith.mulf %50, %54 : vector<8x128xf32>
    %56 = vector.broadcast %7 : vector<1x128xf32> to vector<8x128xf32>
    %57 = arith.mulf %55, %56 : vector<8x128xf32>
    %58 = vector.broadcast %8 : vector<1x128xf32> to vector<8x128xf32>
    %59 = arith.addf %57, %58 : vector<8x128xf32>
    %c0_25 = arith.constant 0 : index
    %c0_26 = arith.constant 0 : index
    %60 = vector.load %arg10[%c0_25, %c0_26] : memref<8x128xf32, #tpu.memory_space<vmem>>, vector<8x128xf32>
    tpu.vector_store %arg10[%c0_25, %c0_26], %59 {strides = array<i32>} : memref<8x128xf32, #tpu.memory_space<vmem>>, vector<8x128xf32>,
    return
  }
  func.func @transform_0(%arg0: i32) -> (i32, i32) {
    %c0_i32 = arith.constant 0 : i32
    %c0_i32_0 = arith.constant 0 : i32
    return %arg0, %c0_i32 : i32, i32
  }
  func.func @transform_1(%arg0: i32) -> (i32, i32) {
    %c0_i32 = arith.constant 0 : i32
    %c0_i32_0 = arith.constant 0 : i32
    return %arg0, %c0_i32 : i32, i32
  }
  func.func @transform_2(%arg0: i32) -> (i32, i32) {
    %c0_i32 = arith.constant 0 : i32
    %c0_i32_0 = arith.constant 0 : i32
    %c0_i32_1 = arith.constant 0 : i32
    return %c0_i32, %c0_i32_0 : i32, i32
  }
  func.func @transform_3(%arg0: i32) -> (i32, i32) {
    %c0_i32 = arith.constant 0 : i32
    %c0_i32_0 = arith.constant 0 : i32
    %c0_i32_1 = arith.constant 0 : i32
    return %c0_i32, %c0_i32_0 : i32, i32
  }
  func.func @transform_4(%arg0: i32) -> (i32, i32) {
    %c0_i32 = arith.constant 0 : i32
    %c0_i32_0 = arith.constant 0 : i32
    %c0_i32_1 = arith.constant 0 : i32
    return %c0_i32, %c0_i32_0 : i32, i32
  }
  func.func @transform_5(%arg0: i32) -> (i32, i32) {
    %c0_i32 = arith.constant 0 : i32
    %c0_i32_0 = arith.constant 0 : i32
    %c0_i32_1 = arith.constant 0 : i32
    return %c0_i32, %c0_i32_0 : i32, i32
  }
  func.func @transform_6(%arg0: i32) -> (i32, i32) {
    %c0_i32 = arith.constant 0 : i32
    %c0_i32_0 = arith.constant 0 : i32
    %c0_i32_1 = arith.constant 0 : i32
    return %c0_i32, %c0_i32_0 : i32, i32
  }
  func.func @transform_7(%arg0: i32) -> (i32, i32) {
    %c0_i32 = arith.constant 0 : i32
    %c0_i32_0 = arith.constant 0 : i32
    %c0_i32_1 = arith.constant 0 : i32
    return %c0_i32, %c0_i32_0 : i32, i32
  }
  func.func @transform_8(%arg0: i32) -> (i32, i32) {
    %c0_i32 = arith.constant 0 : i32
    %c0_i32_0 = arith.constant 0 : i32
    %c0_i32_1 = arith.constant 0 : i32
    return %c0_i32, %c0_i32_0 : i32, i32
  }
  func.func @transform_9(%arg0: i32) -> (i32, i32) {
    %c0_i32 = arith.constant 0 : i32
    %c0_i32_0 = arith.constant 0 : i32
    return %arg0, %c0_i32 : i32, i32
  }
}

</mosaic_0001>

<llo_original>
// kernel: tpu_custom_call.1
$region0: #{tpu_custom_call.1}
  #allocation0 [shape = 'u32[]', space=smem, size = 0x4, offset = 0x4, fixed_abs, tag = 'smem constant byte address 0x4 - core index']
  #allocation1 [shape = 'u32[144,128]{1,0:T(1,128)}', space=vmem, size = 0x12000, scoped, tag = 'internal scratch']
  %s0 = inlined_call_operand.hbm [shape: bf16[8,16], index: 0, kind: input, shape index: {}]
  %s1 = inlined_call_operand.hbm [shape: f32[8,128], index: 1, kind: input, shape index: {}]
  %s2 = inlined_call_operand.hbm [shape: bf16[16,384], index: 2, kind: input, shape index: {}]
  %s3 = inlined_call_operand.hbm [shape: bf16[128,384], index: 3, kind: input, shape index: {}]
  %s4 = inlined_call_operand.vmem [shape: f32[1,256], index: 4, kind: input, shape index: {}]
  %s5 = inlined_call_operand.vmem [shape: f32[1,128], index: 5, kind: input, shape index: {}]
  %s6 = inlined_call_operand.vmem [shape: f32[1,128], index: 6, kind: input, shape index: {}]
  %s7 = inlined_call_operand.vmem [shape: f32[1,128], index: 7, kind: input, shape index: {}]
  %s8 = inlined_call_operand.vmem [shape: f32[1,128], index: 8, kind: input, shape index: {}]
  %s9 = inlined_call_operand.hbm [shape: f32[8,128], index: 9, kind: output, shape index: {}]
  %s10 = sld [smem:[#allocation0]]
  $region62: #{tpu_custom_call.1} parent=0
    _
  %s12 = ssub.s32 1, %s10
  %s13 = scalar_select 0, %s12, %s10
  $region1: #{tpu_custom_call.1} parent=0
    #allocation2 [shape = 'u8[2048]{0}', space=vmem, size = 0x800, scoped, tag = 'input window, operand 0, single buffered']
    #allocation3 [shape = 's32[1]{0}', space=sflag, size = 0x4, scoped, tag = 'scoped memory for tpu_custom_call.1']
    #allocation4 [shape = 's32[1]{0}', space=sflag, size = 0x4, scoped, tag = 'scoped memory for tpu_custom_call.1']
    #allocation5 [shape = 'u8[4096]{0}', space=vmem, size = 0x1000, scoped, tag = 'input window, operand 1, single buffered']
    #allocation6 [shape = 's32[1]{0}', space=sflag, size = 0x4, scoped, tag = 'scoped memory for tpu_custom_call.1']
    #allocation7 [shape = 'u8[12288]{0}', space=vmem, size = 0x3000, scoped, tag = 'input window, operand 2, single buffered']
    #allocation8 [shape = 'u8[98304]{0}', space=vmem, size = 0x18000, scoped, tag = 'input window, operand 3, single buffered']
    #allocation9 [shape = 's32[1]{0}', space=sflag, size = 0x4, scoped, tag = 'scoped memory for tpu_custom_call.1']
    #allocation10 [shape = 'u8[4096]{0}', space=vmem, size = 0x1000, scoped, tag = 'output window, operand 0, single buffered']
    %14 = vsyncpa [#allocation3], 0
    %15 = vsyncpa [#allocation6], 0
    %16 = vsyncpa [#allocation9], 0
    %17 = vsyncpa [#allocation4], 0
    // Predicated region
    $region2: #{tpu_custom_call.1} parent=1 // pred_check
      _
    $region3: #{tpu_custom_call.1} parent=1 // pred_check_branch
      %19 = sbr.rel (0) target = $region5
    $region4: #{tpu_custom_call.1} parent=1 // pred_region
      %s21 = ssub.s32 64, 64
      %22 = vsyncadd [#allocation3], %s21
      %s24 = sshll.u32 [#allocation2], 4
      %s25 = int_to_ptr.vmem [resolvable:$true] %s24
      %27 = dma.hbm_to_vmem [thread:$0]  %s0, 64, %s25, [#allocation3]
    $region5: #{tpu_custom_call.1} parent=1 // pred_fallthru
      _
    // Predicated region
    $region6: #{tpu_custom_call.1} parent=1 // pred_check
      _
    $region7: #{tpu_custom_call.1} parent=1 // pred_check_branch
      %29 = sbr.rel (0) target = $region9
    $region8: #{tpu_custom_call.1} parent=1 // pred_region
      %s31 = ssub.s32 128, 128
      %32 = vsyncadd [#allocation6], %s31
      %s34 = sshll.u32 [#allocation5], 4
      %s35 = int_to_ptr.vmem [resolvable:$true] %s34
      %37 = dma.hbm_to_vmem [thread:$0]  %s1, 128, %s35, [#allocation6]
    $region9: #{tpu_custom_call.1} parent=1 // pred_fallthru
      _
    // Predicated region
    $region10: #{tpu_custom_call.1} parent=1 // pred_check
      _
    $region11: #{tpu_custom_call.1} parent=1 // pred_check_branch
      %39 = sbr.rel (0) target = $region13
    $region12: #{tpu_custom_call.1} parent=1 // pred_region
      %s41 = ssub.s32 384, 384
      %42 = vsyncadd [#allocation6], %s41
      %s43 = sshll.u32 [#allocation7], 4
      %s44 = int_to_ptr.vmem [resolvable:$true] %s43
      %49 = dma.hbm_to_vmem [thread:$0]  %s2, 384, %s44, [#allocation6], 192, 192, 12
    $region13: #{tpu_custom_call.1} parent=1 // pred_fallthru
      _
    // Predicated region
    $region14: #{tpu_custom_call.1} parent=1 // pred_check
      _
    $region15: #{tpu_custom_call.1} parent=1 // pred_check_branch
      %51 = sbr.rel (0) target = $region17
    $region16: #{tpu_custom_call.1} parent=1 // pred_region
      %s53 = ssub.s32 3072, 3072
      %54 = vsyncadd [#allocation9], %s53
      %s55 = sshll.u32 [#allocation8], 4
      %s56 = int_to_ptr.vmem [resolvable:$true] %s55
      %61 = dma.hbm_to_vmem [thread:$0]  %s3, 3072, %s56, [#allocation9], 192, 192, 12
    $region17: #{tpu_custom_call.1} parent=1 // pred_fallthru
      _
    // Predicated region
    $region18: #{tpu_custom_call.1} parent=1 // pred_check
      _
    $region19: #{tpu_custom_call.1} parent=1 // pred_check_branch
      %63 = sbr.rel (0) target = $region21
    $region20: #{tpu_custom_call.1} parent=1 // pred_region
      _
    $region21: #{tpu_custom_call.1} parent=1 // pred_fallthru
      _
    // Predicated region
    $region22: #{tpu_custom_call.1} parent=1 // pred_check
      _
    $region23: #{tpu_custom_call.1} parent=1 // pred_check_branch
      %65 = sbr.rel (0) target = $region25
    $region24: #{tpu_custom_call.1} parent=1 // pred_region
      _
    $region25: #{tpu_custom_call.1} parent=1 // pred_fallthru
      _
    // Predicated region
    $region26: #{tpu_custom_call.1} parent=1 // pred_check
      _
    $region27: #{tpu_custom_call.1} parent=1 // pred_check_branch
      %67 = sbr.rel (0) target = $region29
    $region28: #{tpu_custom_call.1} parent=1 // pred_region
      _
    $region29: #{tpu_custom_call.1} parent=1 // pred_fallthru
      _
    // Predicated region
    $region30: #{tpu_custom_call.1} parent=1 // pred_check
      _
    $region31: #{tpu_custom_call.1} parent=1 // pred_check_branch
      %69 = sbr.rel (0) target = $region33
    $region32: #{tpu_custom_call.1} parent=1 // pred_region
      _
    $region33: #{tpu_custom_call.1} parent=1 // pred_fallthru
      _
    // Predicated region
    $region34: #{tpu_custom_call.1} parent=1 // pred_check
      _
    $region35: #{tpu_custom_call.1} parent=1 // pred_check_branch
      %71 = sbr.rel (0) target = $region37
    $region36: #{tpu_custom_call.1} parent=1 // pred_region
      _
    $region37: #{tpu_custom_call.1} parent=1 // pred_fallthru
      _
    // Predicated region
    $region38: #{tpu_custom_call.1} parent=1 // pred_check
      _
    $region39: #{tpu_custom_call.1} parent=1 // pred_check_branch
      %73 = sbr.rel (0) target = $region41
    $region40: #{tpu_custom_call.1} parent=1 // pred_region
      %74 = dma.done [#allocation3], 64
    $region41: #{tpu_custom_call.1} parent=1 // pred_fallthru
      _
    // Predicated region
    $region42: #{tpu_custom_call.1} parent=1 // pred_check
      _
    $region43: #{tpu_custom_call.1} parent=1 // pred_check_branch
      %76 = sbr.rel (0) target = $region45
    $region44: #{tpu_custom_call.1} parent=1 // pred_region
      %77 = dma.done [#allocation6], 128
    $region45: #{tpu_custom_call.1} parent=1 // pred_fallthru
      _
    // Predicated region
    $region46: #{tpu_custom_call.1} parent=1 // pred_check
      _
    $region47: #{tpu_custom_call.1} parent=1 // pred_check_branch
      %79 = sbr.rel (0) target = $region49
    $region48: #{tpu_custom_call.1} parent=1 // pred_region
      %80 = dma.done [#allocation6], 384
    $region49: #{tpu_custom_call.1} parent=1 // pred_fallthru
      _
    // Predicated region
    $region50: #{tpu_custom_call.1} parent=1 // pred_check
      _
    $region51: #{tpu_custom_call.1} parent=1 // pred_check_branch
      %82 = sbr.rel (0) target = $region53
    $region52: #{tpu_custom_call.1} parent=1 // pred_region
      %83 = dma.done [#allocation9], 3072
    $region53: #{tpu_custom_call.1} parent=1 // pred_fallthru
      _
    %v85 = vld [vmem:[#allocation2] sm:$0xf]
    %v86 = vld [vmem:[#allocation5] sm:$0xff]
    %v87 = vld [vmem:[#allocation7] sm:$0xff]
    %v88 = vld [vmem:[#allocation7 + $0x8] sm:$0xf]
    %v89 = vld [vmem:[#allocation7 + $0xc] sm:$0xff]
    %v90 = vld [vmem:[#allocation7 + $0x14] sm:$0xf]
    %v91 = vld [vmem:[#allocation8] sm:$0xff]
    %v92 = vld [vmem:[#allocation8 + $0x8] sm:$0xf]
    %v93 = vld [vmem:[#allocation8 + $0xc] sm:$0xff]
    %v94 = vld [vmem:[#allocation8 + $0x14] sm:$0xf]
    %v95 = vld [vmem:[#allocation8 + $0x18] sm:$0xff]
    %v96 = vld [vmem:[#allocation8 + $0x20] sm:$0xf]
    %v97 = vld [vmem:[#allocation8 + $0x24] sm:$0xff]
    %v98 = vld [vmem:[#allocation8 + $0x2c] sm:$0xf]
    %v99 = vld [vmem:[#allocation8 + $0x30] sm:$0xff]
    %v100 = vld [vmem:[#allocation8 + $0x38] sm:$0xf]
    %v101 = vld [vmem:[#allocation8 + $0x3c] sm:$0xff]
    %v102 = vld [vmem:[#allocation8 + $0x44] sm:$0xf]
    %v103 = vld [vmem:[#allocation8 + $0x48] sm:$0xff]
    %v104 = vld [vmem:[#allocation8 + $0x50] sm:$0xf]
    %v105 = vld [vmem:[#allocation8 + $0x54] sm:$0xff]
    %v106 = vld [vmem:[#allocation8 + $0x5c] sm:$0xf]
    %v107 = vld [vmem:[#allocation8 + $0x60] sm:$0xff]
    %v108 = vld [vmem:[#allocation8 + $0x68] sm:$0xf]
    %v109 = vld [vmem:[#allocation8 + $0x6c] sm:$0xff]
    %v110 = vld [vmem:[#allocation8 + $0x74] sm:$0xf]
    %v111 = vld [vmem:[#allocation8 + $0x78] sm:$0xff]
    %v112 = vld [vmem:[#allocation8 + $0x80] sm:$0xf]
    %v113 = vld [vmem:[#allocation8 + $0x84] sm:$0xff]
    %v114 = vld [vmem:[#allocation8 + $0x8c] sm:$0xf]
    %v115 = vld [vmem:[#allocation8 + $0x90] sm:$0xff]
    %v116 = vld [vmem:[#allocation8 + $0x98] sm:$0xf]
    %v117 = vld [vmem:[#allocation8 + $0x9c] sm:$0xff]
    %v118 = vld [vmem:[#allocation8 + $0xa4] sm:$0xf]
    %v119 = vld [vmem:[#allocation8 + $0xa8] sm:$0xff]
    %v120 = vld [vmem:[#allocation8 + $0xb0] sm:$0xf]
    %v121 = vld [vmem:[#allocation8 + $0xb4] sm:$0xff]
    %v122 = vld [vmem:[#allocation8 + $0xbc] sm:$0xf]
    %v123 = vld [vmem:[%s4] sm:$0x3]
    %v124 = vld [vmem:[%s5] sm:$0x1]
    %v125 = vld [vmem:[%s6] sm:$0x1]
    %v126 = vld [vmem:[%s7] sm:$0x1]
    %v127 = vld [vmem:[%s8] sm:$0x1]
    %v132 = vunpack.c.l.b16 %v87
    %v133 = vunpack.c.h.b16 %v87
    %v134 = vunpack.c.l.b16 %v88
    %v135 = vunpack.c.l.b16 %v89
    %v136 = vunpack.c.h.b16 %v89
    %v137 = vunpack.c.l.b16 %v90
    %v138 = vpack.c.b16 %v135, %v132
    %v139 = vpack.c.b16 %v136, %v133
    %v140 = vpack.c.b16 %v137, %v134
    %vm144 = vcmask 130048
    %v146 = vsel %vm144, %v85, 0
    %148 = vmatprep.subr.bf16.mxu0 0
    %149 = vmatpush1.bf16.msra.mxu0 0
    %150 = vmatprep.subr.bf16.mxu0 0
    %151 = vmatpush1.bf16.msra.mxu0 0
    %152 = vmatprep.subr.bf16.mxu0 0
    %153 = vmatpush1.bf16.msra.mxu0 0
    %154 = vmatprep.subr.bf16.mxu0 0
    %155 = vmatpush1.bf16.msra.mxu0 0
    %156 = vmatprep.subr.bf16.mxu0 0
    %157 = vmatpush1.bf16.msra.mxu0 0
    %158 = vmatprep.subr.bf16.mxu0 0
    %159 = vmatpush1.bf16.msra.mxu0 0
    %160 = vmatprep.subr.bf16.mxu0 0
    %161 = vmatpush1.bf16.msra.mxu0 0
    %162 = vmatprep.subr.bf16.mxu0 %v139
    %163 = vmatpush1.bf16.msra.mxu0 %v138
    %164 = vmatprep.subr.bf16.mxu0 0
    %165 = vmatpush2.bf16.msra.mxu0 0
    %166 = vmatprep.subr.bf16.mxu0 0
    %167 = vmatpush2.bf16.msra.mxu0 0
    %168 = vmatprep.subr.bf16.mxu0 0
    %169 = vmatpush2.bf16.msra.mxu0 0
    %170 = vmatprep.subr.bf16.mxu0 0
    %171 = vmatpush2.bf16.msra.mxu0 0
    %172 = vmatprep.subr.bf16.mxu0 0
    %173 = vmatpush2.bf16.msra.mxu0 0
    %174 = vmatprep.subr.bf16.mxu0 0
    %175 = vmatpush2.bf16.msra.mxu0 0
    %176 = vmatprep.subr.bf16.mxu0 0
    %177 = vmatpush2.bf16.msra.mxu0 0
    %178 = vmatprep.subr.bf16.mxu0 0
    %179 = vmatpush2.bf16.msra.mxu0 0
    %180 = vmatprep.mubr.bf16.mxu0 0
    %181 = vmatmul.mubr.bf16.gmra.mxu0 %v146
    %v182 = vpop.f32.mrf.mxu0
    %v183 = vadd.f32 0.0, %v182
    %v184 = vpop.f32.mrf.mxu0
    %v185 = vadd.f32 0.0, %v184
    %v186 = vpop.f32.mrf.mxu0
    %v187 = vpop.f32.mrf.mxu0
    %188 = vdwg.mxu0
    %189 = vmatprep.subr.bf16.mxu0 0
    %190 = vmatpush1.bf16.msra.mxu0 0
    %191 = vmatprep.subr.bf16.mxu0 0
    %192 = vmatpush1.bf16.msra.mxu0 0
    %193 = vmatprep.subr.bf16.mxu0 0
    %194 = vmatpush1.bf16.msra.mxu0 0
    %195 = vmatprep.subr.bf16.mxu0 0
    %196 = vmatpush1.bf16.msra.mxu0 0
    %197 = vmatprep.subr.bf16.mxu0 0
    %198 = vmatpush1.bf16.msra.mxu0 0
    %199 = vmatprep.subr.bf16.mxu0 0
    %200 = vmatpush1.bf16.msra.mxu0 0
    %201 = vmatprep.subr.bf16.mxu0 0
    %202 = vmatpush1.bf16.msra.mxu0 0
    %203 = vmatprep.subr.bf16.mxu0 0
    %204 = vmatpush1.bf16.msra.mxu0 %v140
    %205 = vmatprep.subr.bf16.mxu0 0
    %206 = vmatpush2.bf16.msra.mxu0 0
    %207 = vmatprep.subr.bf16.mxu0 0
    %208 = vmatpush2.bf16.msra.mxu0 0
    %209 = vmatprep.subr.bf16.mxu0 0
    %210 = vmatpush2.bf16.msra.mxu0 0
    %211 = vmatprep.subr.bf16.mxu0 0
    %212 = vmatpush2.bf16.msra.mxu0 0
    %213 = vmatprep.subr.bf16.mxu0 0
    %214 = vmatpush2.bf16.msra.mxu0 0
    %215 = vmatprep.subr.bf16.mxu0 0
    %216 = vmatpush2.bf16.msra.mxu0 0
    %217 = vmatprep.subr.bf16.mxu0 0
    %218 = vmatpush2.bf16.msra.mxu0 0
    %219 = vmatprep.subr.bf16.mxu0 0
    %220 = vmatpush2.bf16.msra.mxu0 0
    %221 = vmatprep.mubr.bf16.mxu0 0
    %222 = vmatmul.mubr.bf16.gmra.mxu0 %v146
    %v223 = vpop.f32.mrf.mxu0
    %v224 = vadd.f32 0.0, %v223
    %v225 = vpop.f32.mrf.mxu0
    %v226 = vpop.f32.mrf.mxu0
    %v227 = vpop.f32.mrf.mxu0
    %228 = vdwg.mxu0
    %v229 = vpack.c.bf16 %v86, %v86
    %v262 = vunpack.c.l.b16 %v91
    %v263 = vunpack.c.h.b16 %v91
    %v264 = vunpack.c.l.b16 %v92
    %v265 = vunpack.c.l.b16 %v93
    %v266 = vunpack.c.h.b16 %v93
    %v267 = vunpack.c.l.b16 %v94
    %v268 = vunpack.c.l.b16 %v95
    %v269 = vunpack.c.h.b16 %v95
    %v270 = vunpack.c.l.b16 %v96
    %v271 = vunpack.c.l.b16 %v97
    %v272 = vunpack.c.h.b16 %v97
    %v273 = vunpack.c.l.b16 %v98
    %v274 = vunpack.c.l.b16 %v99
    %v275 = vunpack.c.h.b16 %v99
    %v276 = vunpack.c.l.b16 %v100
    %v277 = vunpack.c.l.b16 %v101
    %v278 = vunpack.c.h.b16 %v101
    %v279 = vunpack.c.l.b16 %v102
    %v280 = vunpack.c.l.b16 %v103
    %v281 = vunpack.c.h.b16 %v103
    %v282 = vunpack.c.l.b16 %v104
    %v283 = vunpack.c.l.b16 %v105
    %v284 = vunpack.c.h.b16 %v105
    %v285 = vunpack.c.l.b16 %v106
    %v286 = vunpack.c.l.b16 %v107
    %v287 = vunpack.c.h.b16 %v107
    %v288 = vunpack.c.l.b16 %v108
    %v289 = vunpack.c.l.b16 %v109
    %v290 = vunpack.c.h.b16 %v109
    %v291 = vunpack.c.l.b16 %v110
    %v292 = vunpack.c.l.b16 %v111
    %v293 = vunpack.c.h.b16 %v111
    %v294 = vunpack.c.l.b16 %v112
    %v295 = vunpack.c.l.b16 %v113
    %v296 = vunpack.c.h.b16 %v113
    %v297 = vunpack.c.l.b16 %v114
    %v298 = vunpack.c.l.b16 %v115
    %v299 = vunpack.c.h.b16 %v115
    %v300 = vunpack.c.l.b16 %v116
    %v301 = vunpack.c.l.b16 %v117
    %v302 = vunpack.c.h.b16 %v117
    %v303 = vunpack.c.l.b16 %v118
    %v304 = vunpack.c.l.b16 %v119
    %v305 = vunpack.c.h.b16 %v119
    %v306 = vunpack.c.l.b16 %v120
    %v307 = vunpack.c.l.b16 %v121
    %v308 = vunpack.c.h.b16 %v121
    %v309 = vunpack.c.l.b16 %v122
    %v310 = vpack.c.b16 %v265, %v262
    %v311 = vpack.c.b16 %v266, %v263
    %v312 = vpack.c.b16 %v267, %v264
    %v313 = vpack.c.b16 %v271, %v268
    %v314 = vpack.c.b16 %v272, %v269
    %v315 = vpack.c.b16 %v273, %v270
    %v316 = vpack.c.b16 %v277, %v274
    %v317 = vpack.c.b16 %v278, %v275
    %v318 = vpack.c.b16 %v279, %v276
    %v319 = vpack.c.b16 %v283, %v280
    %v320 = vpack.c.b16 %v284, %v281
    %v321 = vpack.c.b16 %v285, %v282
    %v322 = vpack.c.b16 %v289, %v286
    %v323 = vpack.c.b16 %v290, %v287
    %v324 = vpack.c.b16 %v291, %v288
    %v325 = vpack.c.b16 %v295, %v292
    %v326 = vpack.c.b16 %v296, %v293
    %v327 = vpack.c.b16 %v297, %v294
    %v328 = vpack.c.b16 %v301, %v298
    %v329 = vpack.c.b16 %v302, %v299
    %v330 = vpack.c.b16 %v303, %v300
    %v331 = vpack.c.b16 %v307, %v304
    %v332 = vpack.c.b16 %v308, %v305
    %v333 = vpack.c.b16 %v309, %v306
    %358 = vmatprep.subr.bf16.mxu0 %v332
    %359 = vmatpush1.bf16.msra.mxu0 %v331
    %360 = vmatprep.subr.bf16.mxu0 %v329
    %361 = vmatpush1.bf16.msra.mxu0 %v328
    %362 = vmatprep.subr.bf16.mxu0 %v326
    %363 = vmatpush1.bf16.msra.mxu0 %v325
    %364 = vmatprep.subr.bf16.mxu0 %v323
    %365 = vmatpush1.bf16.msra.mxu0 %v322
    %366 = vmatprep.subr.bf16.mxu0 %v320
    %367 = vmatpush1.bf16.msra.mxu0 %v319
    %368 = vmatprep.subr.bf16.mxu0 %v317
    %369 = vmatpush1.bf16.msra.mxu0 %v316
    %370 = vmatprep.subr.bf16.mxu0 %v314
    %371 = vmatpush1.bf16.msra.mxu0 %v313
    %372 = vmatprep.subr.bf16.mxu0 %v311
    %373 = vmatpush1.bf16.msra.mxu0 %v310
    %374 = vmatprep.subr.bf16.mxu0 0
    %375 = vmatpush2.bf16.msra.mxu0 0
    %376 = vmatprep.subr.bf16.mxu0 0
    %377 = vmatpush2.bf16.msra.mxu0 0
    %378 = vmatprep.subr.bf16.mxu0 0
    %379 = vmatpush2.bf16.msra.mxu0 0
    %380 = vmatprep.subr.bf16.mxu0 0
    %381 = vmatpush2.bf16.msra.mxu0 0
    %382 = vmatprep.subr.bf16.mxu0 0
    %383 = vmatpush2.bf16.msra.mxu0 0
    %384 = vmatprep.subr.bf16.mxu0 0
    %385 = vmatpush2.bf16.msra.mxu0 0
    %386 = vmatprep.subr.bf16.mxu0 0
    %387 = vmatpush2.bf16.msra.mxu0 0
    %388 = vmatprep.subr.bf16.mxu0 0
    %389 = vmatpush2.bf16.msra.mxu0 0
    %390 = vmatprep.mubr.bf16.mxu0 0
    %391 = vmatmul.mubr.bf16.gmra.mxu0 %v229
    %v392 = vpop.f32.mrf.mxu0
    %v393 = vadd.f32 0.0, %v392
    %v394 = vpop.f32.mrf.mxu0
    %v395 = vadd.f32 0.0, %v394
    %v396 = vpop.f32.mrf.mxu0
    %v397 = vpop.f32.mrf.mxu0
    %398 = vdwg.mxu0
    %399 = vmatprep.subr.bf16.mxu0 0
    %400 = vmatpush1.bf16.msra.mxu0 %v333
    %401 = vmatprep.subr.bf16.mxu0 0
    %402 = vmatpush1.bf16.msra.mxu0 %v330
    %403 = vmatprep.subr.bf16.mxu0 0
    %404 = vmatpush1.bf16.msra.mxu0 %v327
    %405 = vmatprep.subr.bf16.mxu0 0
    %406 = vmatpush1.bf16.msra.mxu0 %v324
    %407 = vmatprep.subr.bf16.mxu0 0
    %408 = vmatpush1.bf16.msra.mxu0 %v321
    %409 = vmatprep.subr.bf16.mxu0 0
    %410 = vmatpush1.bf16.msra.mxu0 %v318
    %411 = vmatprep.subr.bf16.mxu0 0
    %412 = vmatpush1.bf16.msra.mxu0 %v315
    %413 = vmatprep.subr.bf16.mxu0 0
    %414 = vmatpush1.bf16.msra.mxu0 %v312
    %415 = vmatprep.subr.bf16.mxu0 0
    %416 = vmatpush2.bf16.msra.mxu0 0
    %417 = vmatprep.subr.bf16.mxu0 0
    %418 = vmatpush2.bf16.msra.mxu0 0
    %419 = vmatprep.subr.bf16.mxu0 0
    %420 = vmatpush2.bf16.msra.mxu0 0
    %421 = vmatprep.subr.bf16.mxu0 0
    %422 = vmatpush2.bf16.msra.mxu0 0
    %423 = vmatprep.subr.bf16.mxu0 0
    %424 = vmatpush2.bf16.msra.mxu0 0
    %425 = vmatprep.subr.bf16.mxu0 0
    %426 = vmatpush2.bf16.msra.mxu0 0
    %427 = vmatprep.subr.bf16.mxu0 0
    %428 = vmatpush2.bf16.msra.mxu0 0
    %429 = vmatprep.subr.bf16.mxu0 0
    %430 = vmatpush2.bf16.msra.mxu0 0
    %431 = vmatprep.mubr.bf16.mxu0 0
    %432 = vmatmul.mubr.bf16.gmra.mxu0 %v229
    %v433 = vpop.f32.mrf.mxu0
    %v434 = vadd.f32 0.0, %v433
    %v435 = vpop.f32.mrf.mxu0
    %v436 = vpop.f32.mrf.mxu0
    %v437 = vpop.f32.mrf.mxu0
    %438 = vdwg.mxu0
    %v439 = vadd.f32 %v183, %v393
    %v440 = vadd.f32 %v185, %v395
    %v442 = vlaneseq
    %v443 = vshrl.u32 %v442, 7
    %v444 = vsub.s32 0, %v443
    %v445 = vrot.slane %v123, %v444
    %v446 = vlaneseq
    %v447 = vshrl.u32 %v446, 7
    %v448 = vsub.s32 1, %v447
    %v449 = vrot.slane %v123, %v448
    %v452 = vadd.f32 %v439, %v445
    %v453 = vadd.f32 %v440, %v449
    %v454 = vxor.u32 %v452, 2147483648
    %v455 = vxor.u32 %v453, 2147483648
    %v456 = vmul.f32 %v454, 1.442695
    %v457 = vpow.pop %v456
    %v458 = vmul.f32 %v455, 1.442695
    %v459 = vpow.pop %v458
    %v460 = vadd.f32 %v457, 1.0
    %v461 = vadd.f32 %v459, 1.0
    %v462 = vrcp.pop %v460
    %v463 = vmul.f32 1.0, %v462
    %v464 = vrcp.pop %v461
    %v465 = vmul.f32 1.0, %v464
    %v467 = vlaneseq
    %v468 = vshrl.u32 %v467, 7
    %v469 = vsub.s32 0, %v468
    %v470 = vrot.slane %v124, %v469
    %v472 = vadd.f32 %v224, %v470
    %v474 = vlaneseq
    %v475 = vshrl.u32 %v474, 7
    %v476 = vsub.s32 0, %v475
    %v477 = vrot.slane %v125, %v476
    %v479 = vadd.f32 %v434, %v477
    %v480 = vmul.f32 %v463, %v479
    %v481 = vadd.f32 %v472, %v480
    %v482 = vtanh.pop %v481
    %v483 = vsub.f32 1.0, %v465
    %v484 = vmul.f32 %v483, %v482
    %v485 = vmul.f32 %v465, %v86
    %v486 = vadd.f32 %v484, %v485
    %487 = vadd.xlane.f32.xlu0 %v486
    %v488 = vpop.xlane.xlu0 %487
    %v489 = vmul.f32 %v488, 0.03125
    %v490 = vmul.f32 %v486, %v486
    %491 = vadd.xlane.f32.xlu0 %v490
    %v492 = vpop.xlane.xlu0 %491
    %v493 = vmul.f32 %v492, 0.03125
    %v494 = vmul.f32 %v489, %v489
    %v495 = vsub.f32 %v493, %v494
    %v496 = vsub.f32 %v486, %v489
    %v497 = vadd.f32 %v495, 1e-05
    %v498 = vrsqrt.pop %v497
    %v499 = vmul.f32 %v496, %v498
    %v501 = vlaneseq
    %v502 = vshrl.u32 %v501, 7
    %v503 = vsub.s32 0, %v502
    %v504 = vrot.slane %v126, %v503
    %v506 = vmul.f32 %v499, %v504
    %v508 = vlaneseq
    %v509 = vshrl.u32 %v508, 7
    %v510 = vsub.s32 0, %v509
    %v511 = vrot.slane %v127, %v510
    %v513 = vadd.f32 %v506, %v511
    %514 = vst [vmem:[#allocation10] sm:$0xff] %v513
    // Predicated region
    $region54: #{tpu_custom_call.1} parent=1 // pred_check
      _
    $region55: #{tpu_custom_call.1} parent=1 // pred_check_branch
      %516 = sbr.rel (0) target = $region57
    $region56: #{tpu_custom_call.1} parent=1 // pred_region
      %s518 = ssub.s32 128, 128
      %519 = vsyncadd [#allocation4], %s518
      %s521 = sshll.u32 [#allocation10], 4
      %s522 = int_to_ptr.vmem [resolvable:$true] %s521
      %524 = dma.vmem_to_hbm [thread:$0]  %s522, 128, %s9, [#allocation4]
    $region57: #{tpu_custom_call.1} parent=1 // pred_fallthru
      _
    // Predicated region
    $region58: #{tpu_custom_call.1} parent=1 // pred_check
      _
    $region59: #{tpu_custom_call.1} parent=1 // pred_check_branch
      %526 = sbr.rel (0) target = $region61
    $region60: #{tpu_custom_call.1} parent=1 // pred_region
      %527 = dma.done [#allocation4], 128
    $region61: #{tpu_custom_call.1} parent=1 // pred_fallthru
      _
    %528 = vsyncpa [#allocation3], 1
    %529 = vsyncpa [#allocation6], 1
    %530 = vsyncpa [#allocation9], 1
    %531 = vsyncpa [#allocation4], 1

</llo_original>
